<compile_context>
chip_gen: v7x
topology: tpu7x:2x2x1
jax: 0.10.0
libtpu: 0.0.40
codegen_flags: <defaults>
</compile_context>

<pallas_src>
import functools

import jax
import jax.numpy as jnp
from jax import lax
from jax.experimental import pallas as pl
from jax.experimental.pallas import tpu as pltpu


def _adapter_kernel(x_ref, w1_ref, b1_ref, w2_ref, b2_ref, g_ref, beta_ref,
                    o_ref):
    """Fused LayerNorm + bottleneck MLP (exact-erf GELU) + residual add.

    Operates on one (tile_n, E) row tile.  Weight/bias/LN-param blocks have a
    constant index_map so they stay VMEM-resident (single-buffered) across
    grid steps and arrive already cast to their compute dtype.
    """
    x = x_ref[...].astype(jnp.float32)                        # (tile, E)

    # --- LayerNorm over the embedding (lane) axis; eps matches nn.LayerNorm.
    # Variance via E[x^2] - mean^2: the two lane reductions are independent.
    mean = jnp.mean(x, axis=-1, keepdims=True)
    mean_sq = jnp.mean(x * x, axis=-1, keepdims=True)
    var = mean_sq - mean * mean
    xn = (x - mean) * lax.rsqrt(var + 1e-5)
    xn = xn * g_ref[...] + beta_ref[...]

    # --- Linear(E -> B): MXU matmul, f32 accumulation (weights pre-cast) ---
    h = jnp.dot(xn.astype(w1_ref.dtype), w1_ref[...],
                preferred_element_type=jnp.float32)
    h = h + b1_ref[...]                                       # (tile, B)

    # --- GELU (exact erf form, matching nn.GELU default) ---
    h = 0.5 * h * (1.0 + lax.erf(h * 0.7071067811865476))

    # --- Linear(B -> E) ---
    y = jnp.dot(h.astype(w2_ref.dtype), w2_ref[...],
                preferred_element_type=jnp.float32)
    y = y + b2_ref[...]                                       # (tile, E)

    # --- Residual (dropout = identity at inference). Re-read the resident
    # VMEM x tile rather than holding a tile-sized f32 live range.
    o_ref[...] = (x_ref[...].astype(jnp.float32) + y).astype(o_ref.dtype)


def _round_up(v, m):
    return -(-v // m) * m


def _vmem_cap_bytes():
    """~75% of per-core VMEM (headroom for Mosaic internal scratch).
    Falls back to a conservative v7x-sized number if the query fails."""
    try:
        vmem = int(pltpu.get_tpu_info().vmem_capacity_bytes)
    except Exception:
        vmem = 64 * 1024 * 1024
    return (vmem * 3) // 4


def _pick_tile_n(n_rows, embed, bottleneck, x_itemsize, w_itemsize, vmem_cap):
    """Row-tile size: fill the VMEM budget with the double-buffered x/out
    tiles after subtracting the single-buffered resident constants and the
    f32 intermediates; keep the grid at ~>=4 steps for small N."""
    row_mult = max(8, 32 // x_itemsize)                       # sublane packing
    # Single-buffered resident constants: w1/w2 in matmul dtype, small f32 params.
    resident = 2 * embed * bottleneck * w_itemsize + (bottleneck + 3 * embed) * 4
    # Per-row: double-buffered x + out tiles (input dtype) plus f32
    # intermediates (xn, y ~ E each; h, gelu(h) ~ B each).
    per_row = 4 * embed * x_itemsize + 4 * (2 * embed + 2 * bottleneck)
    budget = max(vmem_cap - resident - (2 << 20), per_row * row_mult)
    tile = max(row_mult, (budget // per_row) // row_mult * row_mult)
    tile = min(tile, 2048)                                    # latency cap only
    # Keep >= ~4 grid steps when N allows (v7x 2-TC sharding, pipelining).
    tile = min(tile, max(row_mult, _round_up(-(-n_rows // 4), row_mult)))
    tile = min(tile, _round_up(n_rows, row_mult))
    return int(tile)


def residual_adapter(x, w1, b1, w2, b2, gamma, beta, *, tile_n=None,
                     matmul_dtype=jnp.float32):
    """x: (batch, seq, E). w1: (E, B), w2: (B, E) (pre-transposed in->out),
    b1: (1, B), b2/gamma/beta: (1, E).  Returns array with x's shape/dtype."""
    batch, seq, E = x.shape
    B = w1.shape[1]
    N = batch * seq
    x2d = x.reshape(N, E)

    # Cast constants ONCE here: resident VMEM blocks are already in their
    # compute dtype, so the kernel does zero per-grid-step casts on them.
    w1c = w1.astype(matmul_dtype)
    w2c = w2.astype(matmul_dtype)
    b1c = b1.astype(jnp.float32)
    b2c = b2.astype(jnp.float32)
    gc = gamma.astype(jnp.float32)
    bc = beta.astype(jnp.float32)

    x_itemsize = jnp.dtype(x.dtype).itemsize
    w_itemsize = jnp.dtype(matmul_dtype).itemsize
    row_mult = max(8, 32 // x_itemsize)
    vmem_cap = _vmem_cap_bytes()

    if tile_n is None:
        tile_n = _pick_tile_n(N, E, B, x_itemsize, w_itemsize, vmem_cap)
    # Enforce the dtype-dependent sublane multiple even for explicit tile_n.
    tile_n = int(_round_up(max(int(tile_n), row_mult), row_mult))

    # Zero-pad ragged N so (tile_n, E) tiles divide cleanly.  Padded zero rows
    # go through LayerNorm with var=0 -> rsqrt(eps): finite (xn=0 -> beta
    # path), and they are sliced away below.  Do not remove the eps.
    n_pad = _round_up(N, tile_n)
    if n_pad != N:
        x2d = jnp.pad(x2d, ((0, n_pad - N), (0, 0)))
    grid = (n_pad // tile_n,)

    def _const_spec(shape):
        # Constant blocks: index never changes -> single-buffered in VMEM.
        return pl.BlockSpec(shape, lambda i: (0, 0), pipeline_mode=pl.Buffered(1))

    out2d = pl.pallas_call(
        _adapter_kernel,
        out_shape=jax.ShapeDtypeStruct((n_pad, E), x.dtype),
        grid=grid,
        in_specs=[
            pl.BlockSpec((tile_n, E), lambda i: (i, 0)),      # x row tile
            _const_spec((E, B)),                              # w1 (in, out)
            _const_spec((1, B)),                              # b1
            _const_spec((B, E)),                              # w2 (in, out)
            _const_spec((1, E)),                              # b2
            _const_spec((1, E)),                              # ln gamma
            _const_spec((1, E)),                              # ln beta
        ],
        out_specs=pl.BlockSpec((tile_n, E), lambda i: (i, 0)),
        compiler_params=pltpu.CompilerParams(
            dimension_semantics=("parallel",),                # row tiles independent
            vmem_limit_bytes=vmem_cap),
    )(x2d, w1c, b1c, w2c, b2c, gc, bc)

    if n_pad != N:
        out2d = out2d[:N]
    return out2d.reshape(batch, seq, E)


def residual_adapter_ref(x, w1, b1, w2, b2, gamma, beta):
    """Pure-JAX reference for correctness checking."""
    xf = x.astype(jnp.float32)
    mean = jnp.mean(xf, axis=-1, keepdims=True)
    var = jnp.mean((xf - mean) ** 2, axis=-1, keepdims=True)
    xn = (xf - mean) * lax.rsqrt(var + 1e-5) * gamma[0] + beta[0]
    h = xn @ w1 + b1[0]
    h = 0.5 * h * (1.0 + lax.erf(h / jnp.sqrt(2.0)))
    y = h @ w2 + b2[0]
    return (xf + y).astype(x.dtype)


if __name__ == "__main__":
    # Small shapes consistent with the module's forward: (batch, seq, embed).
    embedding_dim, bottleneck_dim = 128, 256

    key = jax.random.PRNGKey(0)
    kx, kw1, kb1, kw2, kb2, kg, kbt, kx2 = jax.random.split(key, 8)

    # Deterministic parameter init (shapes follow nn.Linear / nn.LayerNorm).
    # NOTE: PyTorch's reset_parameters() zeroes the second Linear; here we use
    # small random values for all params so the full kernel path is exercised.
    w1 = jax.random.normal(kw1, (embedding_dim, bottleneck_dim), jnp.float32) * 0.05
    b1 = jax.random.normal(kb1, (1, bottleneck_dim), jnp.float32) * 0.05
    w2 = jax.random.normal(kw2, (bottleneck_dim, embedding_dim), jnp.float32) * 0.05
    b2 = jax.random.normal(kb2, (1, embedding_dim), jnp.float32) * 0.05
    gamma = 1.0 + 0.05 * jax.random.normal(kg, (1, embedding_dim), jnp.float32)
    beta = 0.05 * jax.random.normal(kbt, (1, embedding_dim), jnp.float32)

    # --- Test 1: small shape, f32 matmul path, tight tolerance ---------------
    x = jax.random.normal(kx, (2, 8, embedding_dim), dtype=jnp.float32)
    out = jax.block_until_ready(residual_adapter(x, w1, b1, w2, b2, gamma, beta))
    ref = residual_adapter_ref(x, w1, b1, w2, b2, gamma, beta)
    assert out.shape == x.shape and out.dtype == x.dtype
    assert jnp.allclose(out, ref, atol=1e-4, rtol=1e-4), (
        float(jnp.max(jnp.abs(out - ref))))

    # --- Test 2: ragged N (padding) + multi-step grid with resident weights --
    x2 = jax.random.normal(kx2, (3, 13, embedding_dim), dtype=jnp.float32)
    out2 = jax.block_until_ready(
        residual_adapter(x2, w1, b1, w2, b2, gamma, beta, tile_n=8))
    ref2 = residual_adapter_ref(x2, w1, b1, w2, b2, gamma, beta)
    assert out2.shape == x2.shape
    assert jnp.allclose(out2, ref2, atol=1e-4, rtol=1e-4), (
        float(jnp.max(jnp.abs(out2 - ref2))))

    # --- Test 3: bf16 matmul operands (f32 accumulation), v6e/v7x perf path --
    out3 = jax.block_until_ready(
        residual_adapter(x, w1, b1, w2, b2, gamma, beta,
                         matmul_dtype=jnp.bfloat16))
    assert jnp.allclose(out3, ref, atol=5e-2, rtol=5e-2), (
        float(jnp.max(jnp.abs(out3 - ref))))

    print("KERNEL_OK")
</pallas_src>

<mosaic_0001>
module attributes {stable_mosaic.version = 11 : i64} {
  func.func @_adapter_kernel(%arg0: i32, %arg1: memref<8x128xf32, #tpu.memory_space<vmem>>, %arg2: memref<128x256xf32, #tpu.memory_space<vmem>>, %arg3: memref<1x256xf32, #tpu.memory_space<vmem>>, %arg4: memref<256x128xf32, #tpu.memory_space<vmem>>, %arg5: memref<1x128xf32, #tpu.memory_space<vmem>>, %arg6: memref<1x128xf32, #tpu.memory_space<vmem>>, %arg7: memref<1x128xf32, #tpu.memory_space<vmem>>, %arg8: memref<8x128xf32, #tpu.memory_space<vmem>>) attributes {dimension_semantics = [#tpu.dimension_semantics<parallel>], iteration_bounds = array<i64: 2>, scalar_prefetch = 0 : i64, scratch_operands = 0 : i64, tpu.core_type = #tpu.core_type<tc>, window_params = [{transform_indices = @transform_0, window_bounds = array<i64: 8, 128>}, {pipeline_mode = #tpu.pipeline_mode<synchronous>, transform_indices = @transform_1, window_bounds = array<i64: 128, 256>}, {pipeline_mode = #tpu.pipeline_mode<synchronous>, transform_indices = @transform_2, window_bounds = array<i64: 1, 256>}, {pipeline_mode = #tpu.pipeline_mode<synchronous>, transform_indices = @transform_3, window_bounds = array<i64: 256, 128>}, {pipeline_mode = #tpu.pipeline_mode<synchronous>, transform_indices = @transform_4, window_bounds = array<i64: 1, 128>}, {pipeline_mode = #tpu.pipeline_mode<synchronous>, transform_indices = @transform_5, window_bounds = array<i64: 1, 128>}, {pipeline_mode = #tpu.pipeline_mode<synchronous>, transform_indices = @transform_6, window_bounds = array<i64: 1, 128>}, {transform_indices = @transform_7, window_bounds = array<i64: 8, 128>}]} {
    %c0 = arith.constant 0 : index
    %c0_0 = arith.constant 0 : index
    %0 = vector.load %arg1[%c0, %c0_0] : memref<8x128xf32, #tpu.memory_space<vmem>>, vector<8x128xf32>
    %cst = arith.constant dense<0.000000e+00> : vector<8xf32>
    %1 = vector.multi_reduction <add>, %0, %cst [1] : vector<8x128xf32> to vector<8xf32>
    %2 = vector.shape_cast %1 : vector<8xf32> to vector<8x1xf32>
    %cst_1 = arith.constant 1.280000e+02 : f32
    %3 = vector.broadcast %cst_1 : f32 to vector<8x1xf32>
    %4 = arith.divf %2, %3 : vector<8x1xf32>
    %5 = arith.mulf %0, %0 : vector<8x128xf32>
    %cst_2 = arith.constant dense<0.000000e+00> : vector<8xf32>
    %6 = vector.multi_reduction <add>, %5, %cst_2 [1] : vector<8x128xf32> to vector<8xf32>
    %7 = vector.shape_cast %6 : vector<8xf32> to vector<8x1xf32>
    %cst_3 = arith.constant 1.280000e+02 : f32
    %8 = vector.broadcast %cst_3 : f32 to vector<8x1xf32>
    %9 = arith.divf %7, %8 : vector<8x1xf32>
    %10 = arith.mulf %4, %4 : vector<8x1xf32>
    %11 = arith.subf %9, %10 : vector<8x1xf32>
    %12 = vector.broadcast %4 : vector<8x1xf32> to vector<8x128xf32>
    %13 = arith.subf %0, %12 : vector<8x128xf32>
    %cst_4 = arith.constant 9.99999974E-6 : f32
    %14 = vector.broadcast %cst_4 : f32 to vector<8x1xf32>
    %15 = arith.addf %11, %14 : vector<8x1xf32>
    %16 = math.rsqrt %15 : vector<8x1xf32>
    %17 = vector.broadcast %16 : vector<8x1xf32> to vector<8x128xf32>
    %18 = arith.mulf %13, %17 : vector<8x128xf32>
    %c0_5 = arith.constant 0 : index
    %c0_6 = arith.constant 0 : index
    %19 = vector.load %arg6[%c0_5, %c0_6] : memref<1x128xf32, #tpu.memory_space<vmem>>, vector<1x128xf32>
    %20 = vector.broadcast %19 : vector<1x128xf32> to vector<8x128xf32>
    %21 = arith.mulf %18, %20 : vector<8x128xf32>
    %c0_7 = arith.constant 0 : index
    %c0_8 = arith.constant 0 : index
    %22 = vector.load %arg7[%c0_7, %c0_8] : memref<1x128xf32, #tpu.memory_space<vmem>>, vector<1x128xf32>
    %23 = vector.broadcast %22 : vector<1x128xf32> to vector<8x128xf32>
    %24 = arith.addf %21, %23 : vector<8x128xf32>
    %c0_9 = arith.constant 0 : index
    %c0_10 = arith.constant 0 : index
    %25 = vector.load %arg2[%c0_9, %c0_10] : memref<128x256xf32, #tpu.memory_space<vmem>>, vector<128x256xf32>
    %cst_11 = arith.constant dense<0.000000e+00> : vector<8x256xf32>
    %26 = tpu.matmul %24, %25, %cst_11 {dimension_numbers = #tpu.dot_dimension_numbers<[1], [0], [0], [1], [0, 0, 1, 1], [], []>} : vector<8x128xf32>, vector<128x256xf32>, vector<8x256xf32> -> vector<8x256xf32>
    %c0_12 = arith.constant 0 : index
    %c0_13 = arith.constant 0 : index
    %27 = vector.load %arg3[%c0_12, %c0_13] : memref<1x256xf32, #tpu.memory_space<vmem>>, vector<1x256xf32>
    %28 = vector.broadcast %27 : vector<1x256xf32> to vector<8x256xf32>
    %29 = arith.addf %26, %28 : vector<8x256xf32>
    %cst_14 = arith.constant 5.000000e-01 : f32
    %30 = vector.broadcast %cst_14 : f32 to vector<8x256xf32>
    %31 = arith.mulf %30, %29 : vector<8x256xf32>
    %cst_15 = arith.constant 0.707106769 : f32
    %32 = vector.broadcast %cst_15 : f32 to vector<8x256xf32>
    %33 = arith.mulf %29, %32 : vector<8x256xf32>
    %34 = math.erf %33 : vector<8x256xf32>
    %cst_16 = arith.constant 1.000000e+00 : f32
    %35 = vector.broadcast %cst_16 : f32 to vector<8x256xf32>
    %36 = arith.addf %35, %34 : vector<8x256xf32>
    %37 = arith.mulf %31, %36 : vector<8x256xf32>
    %c0_17 = arith.constant 0 : index
    %c0_18 = arith.constant 0 : index
    %38 = vector.load %arg4[%c0_17, %c0_18] : memref<256x128xf32, #tpu.memory_space<vmem>>, vector<256x128xf32>
    %cst_19 = arith.constant dense<0.000000e+00> : vector<8x128xf32>
    %39 = tpu.matmul %37, %38, %cst_19 {dimension_numbers = #tpu.dot_dimension_numbers<[1], [0], [0], [1], [0, 0, 1, 1], [], []>} : vector<8x256xf32>, vector<256x128xf32>, vector<8x128xf32> -> vector<8x128xf32>
    %c0_20 = arith.constant 0 : index
    %c0_21 = arith.constant 0 : index
    %40 = vector.load %arg5[%c0_20, %c0_21] : memref<1x128xf32, #tpu.memory_space<vmem>>, vector<1x128xf32>
    %41 = vector.broadcast %40 : vector<1x128xf32> to vector<8x128xf32>
    %42 = arith.addf %39, %41 : vector<8x128xf32>
    %c0_22 = arith.constant 0 : index
    %c0_23 = arith.constant 0 : index
    %43 = vector.load %arg1[%c0_22, %c0_23] : memref<8x128xf32, #tpu.memory_space<vmem>>, vector<8x128xf32>
    %44 = arith.addf %43, %42 : vector<8x128xf32>
    %c0_24 = arith.constant 0 : index
    %c0_25 = arith.constant 0 : index
    %45 = vector.load %arg8[%c0_24, %c0_25] : memref<8x128xf32, #tpu.memory_space<vmem>>, vector<8x128xf32>
    tpu.vector_store %arg8[%c0_24, %c0_25], %44 {strides = array<i32>} : memref<8x128xf32, #tpu.memory_space<vmem>>, vector<8x128xf32>,
    return
  }
  func.func @transform_0(%arg0: i32) -> (i32, i32) {
    %c0_i32 = arith.constant 0 : i32
    %c0_i32_0 = arith.constant 0 : i32
    return %arg0, %c0_i32 : i32, i32
  }
  func.func @transform_1(%arg0: i32) -> (i32, i32) {
    %c0_i32 = arith.constant 0 : i32
    %c0_i32_0 = arith.constant 0 : i32
    %c0_i32_1 = arith.constant 0 : i32
    return %c0_i32, %c0_i32_0 : i32, i32
  }
  func.func @transform_2(%arg0: i32) -> (i32, i32) {
    %c0_i32 = arith.constant 0 : i32
    %c0_i32_0 = arith.constant 0 : i32
    %c0_i32_1 = arith.constant 0 : i32
    return %c0_i32, %c0_i32_0 : i32, i32
  }
  func.func @transform_3(%arg0: i32) -> (i32, i32) {
    %c0_i32 = arith.constant 0 : i32
    %c0_i32_0 = arith.constant 0 : i32
    %c0_i32_1 = arith.constant 0 : i32
    return %c0_i32, %c0_i32_0 : i32, i32
  }
  func.func @transform_4(%arg0: i32) -> (i32, i32) {
    %c0_i32 = arith.constant 0 : i32
    %c0_i32_0 = arith.constant 0 : i32
    %c0_i32_1 = arith.constant 0 : i32
    return %c0_i32, %c0_i32_0 : i32, i32
  }
  func.func @transform_5(%arg0: i32) -> (i32, i32) {
    %c0_i32 = arith.constant 0 : i32
    %c0_i32_0 = arith.constant 0 : i32
    %c0_i32_1 = arith.constant 0 : i32
    return %c0_i32, %c0_i32_0 : i32, i32
  }
  func.func @transform_6(%arg0: i32) -> (i32, i32) {
    %c0_i32 = arith.constant 0 : i32
    %c0_i32_0 = arith.constant 0 : i32
    %c0_i32_1 = arith.constant 0 : i32
    return %c0_i32, %c0_i32_0 : i32, i32
  }
  func.func @transform_7(%arg0: i32) -> (i32, i32) {
    %c0_i32 = arith.constant 0 : i32
    %c0_i32_0 = arith.constant 0 : i32
    return %arg0, %c0_i32 : i32, i32
  }
}

</mosaic_0001>

<llo_original>
// kernel: tpu_custom_call.1
$region0: #{tpu_custom_call.1}
  #allocation0 [shape = 'u32[]', space=smem, size = 0x4, offset = 0x4, fixed_abs, tag = 'smem constant byte address 0x4 - core index']
  #allocation1 [shape = 'u32[144,128]{1,0:T(1,128)}', space=vmem, size = 0x12000, scoped, tag = 'internal scratch']
  %s0 = inlined_call_operand.hbm [shape: f32[16,128], index: 0, kind: input, shape index: {}]
  %s1 = inlined_call_operand.hbm [shape: f32[128,256], index: 1, kind: input, shape index: {}]
  %s2 = inlined_call_operand.vmem [shape: f32[1,256], index: 2, kind: input, shape index: {}]
  %s3 = inlined_call_operand.hbm [shape: f32[256,128], index: 3, kind: input, shape index: {}]
  %s4 = inlined_call_operand.vmem [shape: f32[1,128], index: 4, kind: input, shape index: {}]
  %s5 = inlined_call_operand.vmem [shape: f32[1,128], index: 5, kind: input, shape index: {}]
  %s6 = inlined_call_operand.vmem [shape: f32[1,128], index: 6, kind: input, shape index: {}]
  %s7 = inlined_call_operand.hbm [shape: f32[16,128], index: 7, kind: output, shape index: {}]
  %s8 = sld [smem:[#allocation0]]
  $region73: #{tpu_custom_call.1} parent=0
    _
  %s10 = ssub.s32 1, %s8
  %s11 = scalar_select 0, %s10, %s8
  $region1: #{tpu_custom_call.1} parent=0
    #allocation2 [shape = 'u8[8192]{0}', space=vmem, size = 0x2000, scoped, tag = 'input window, operand 0']
    #allocation3 [shape = 's32[2]{0}', space=sflag, size = 0x8, scoped, tag = 'scoped memory for tpu_custom_call.1']
    #allocation4 [shape = 's32[2]{0}', space=sflag, size = 0x8, scoped, tag = 'scoped memory for tpu_custom_call.1']
    #allocation5 [shape = 'u8[131072]{0}', space=vmem, size = 0x20000, scoped, tag = 'input window, operand 1, single buffered']
    #allocation6 [shape = 's32[1]{0}', space=sflag, size = 0x4, scoped, tag = 'scoped memory for tpu_custom_call.1']
    #allocation7 [shape = 'u8[131072]{0}', space=vmem, size = 0x20000, scoped, tag = 'input window, operand 3, single buffered']
    #allocation8 [shape = 'u8[8192]{0}', space=vmem, size = 0x2000, scoped, tag = 'output window, operand 0']
    %12 = vsyncpa [#allocation3], 0
    %s13 = scalar_lea.sflag [#allocation3], 1
    %14 = vsyncpa %s13, 0
    %15 = vsyncpa [#allocation6], 0
    %16 = vsyncpa [#allocation4], 0
    %s17 = scalar_lea.sflag [#allocation4], 1
    %18 = vsyncpa %s17, 0
    loop: start=0, step=1, limit=4
    $region2: #{tpu_custom_call.1} parent=1 // loop_pre_header
      _
    $region3: #{tpu_custom_call.1} parent=1 // loop_header
      %s20 = sphi 0, %s24
      %p21 = scmp.ge.s32.totalorder %s20, 4
      %s30 = sphi 0, %s32
      %s33 = sphi 0, %s30
      %s34 = sphi 0, %s33
      %s50 = sphi 0, %s34
      %s54 = sphi 0, %s54
      %s56 = sphi 0, %s54
      %s57 = sphi 0, %s56
      %s71 = sphi 0, %s57
      %s75 = sphi 0, %s75
      %s77 = sphi 0, %s75
      %s78 = sphi 0, %s77
      %s92 = sphi 0, %s78
      %s96 = sphi 0, %s96
      %s98 = sphi 0, %s96
      %s99 = sphi 0, %s98
      %s113 = sphi 0, %s99
      %s117 = sphi 0, %s117
      %s119 = sphi 0, %s117
      %s120 = sphi 0, %s119
      %s134 = sphi 0, %s120
      %s138 = sphi 0, %s138
      %s140 = sphi 0, %s138
      %s141 = sphi 0, %s140
      %s155 = sphi 0, %s141
      %s159 = sphi 0, %s159
      %s161 = sphi 0, %s159
      %s162 = sphi 0, %s161
      %s176 = sphi 0, %s162
      %s182 = sphi 0, %s184
      %s185 = sphi 0, %s182
      %s186 = sphi 0, %s185
      %s202 = sphi 0, %s186
    $region4: #{tpu_custom_call.1} parent=1 // loop_header_branch
      %23 = sbr.rel (%p21) target = $region8
    $region5: #{tpu_custom_call.1} parent=1 // loop_body
      %s25 = ssub.s32 %s20, 1
      %s26 = ssub.s32 %s20, 2
      %s27 = sadd.s32 %s20, 1
      %s28 = ssub.s32 %s20, %s27
      %p29 = scmp.eq.s32.totalorder %s28, 0
      %s31 = sadd.s32 %s30, 1
      %s32 = scalar_select %p29, %s30, %s31
      %p35 = pneg %p29
      %p36 = scmp.eq.s32.totalorder %s20, 1
      %p37 = por %p35, %p36
      %p38 = scmp.ne.s32.totalorder %s30, %s33
      %p39 = scmp.eq.s32.totalorder %s20, 0
      %p40 = por %p38, %p39
      %p41 = scmp.ne.s32.totalorder %s30, %s33
      %p42 = scmp.eq.s32.totalorder %s25, 1
      %p43 = por %p41, %p42
      %p44 = scmp.ne.s32.totalorder %s33, %s34
      %p45 = scmp.eq.s32.totalorder %s25, 0
      %p46 = por %p44, %p45
      %p47 = scmp.ne.s32.totalorder %s33, %s34
      %p48 = scmp.eq.s32.totalorder %s26, 1
      %p49 = por %p47, %p48
      %p51 = scmp.ne.s32.totalorder %s34, %s50
      %p52 = scmp.eq.s32.totalorder %s26, 0
      %p53 = por %p51, %p52
      %s55 = sadd.s32 %s54, 1
      %p58 = scmp.eq.s32.totalorder %s20, 1
      %p59 = scmp.ne.s32.totalorder %s54, %s56
      %p60 = scmp.eq.s32.totalorder %s20, 0
      %p61 = por %p59, %p60
      %p62 = scmp.ne.s32.totalorder %s54, %s56
      %p63 = scmp.eq.s32.totalorder %s25, 1
      %p64 = por %p62, %p63
      %p65 = scmp.ne.s32.totalorder %s56, %s57
      %p66 = scmp.eq.s32.totalorder %s25, 0
      %p67 = por %p65, %p66
      %p68 = scmp.ne.s32.totalorder %s56, %s57
      %p69 = scmp.eq.s32.totalorder %s26, 1
      %p70 = por %p68, %p69
      %p72 = scmp.ne.s32.totalorder %s57, %s71
      %p73 = scmp.eq.s32.totalorder %s26, 0
      %p74 = por %p72, %p73
      %s76 = sadd.s32 %s75, 1
      %p79 = scmp.eq.s32.totalorder %s20, 1
      %p80 = scmp.ne.s32.totalorder %s75, %s77
      %p81 = scmp.eq.s32.totalorder %s20, 0
      %p82 = por %p80, %p81
      %p83 = scmp.ne.s32.totalorder %s75, %s77
      %p84 = scmp.eq.s32.totalorder %s25, 1
      %p85 = por %p83, %p84
      %p86 = scmp.ne.s32.totalorder %s77, %s78
      %p87 = scmp.eq.s32.totalorder %s25, 0
      %p88 = por %p86, %p87
      %p89 = scmp.ne.s32.totalorder %s77, %s78
      %p90 = scmp.eq.s32.totalorder %s26, 1
      %p91 = por %p89, %p90
      %p93 = scmp.ne.s32.totalorder %s78, %s92
      %p94 = scmp.eq.s32.totalorder %s26, 0
      %p95 = por %p93, %p94
      %s97 = sadd.s32 %s96, 1
      %p100 = scmp.eq.s32.totalorder %s20, 1
      %p101 = scmp.ne.s32.totalorder %s96, %s98
      %p102 = scmp.eq.s32.totalorder %s20, 0
      %p103 = por %p101, %p102
      %p104 = scmp.ne.s32.totalorder %s96, %s98
      %p105 = scmp.eq.s32.totalorder %s25, 1
      %p106 = por %p104, %p105
      %p107 = scmp.ne.s32.totalorder %s98, %s99
      %p108 = scmp.eq.s32.totalorder %s25, 0
      %p109 = por %p107, %p108
      %p110 = scmp.ne.s32.totalorder %s98, %s99
      %p111 = scmp.eq.s32.totalorder %s26, 1
      %p112 = por %p110, %p111
      %p114 = scmp.ne.s32.totalorder %s99, %s113
      %p115 = scmp.eq.s32.totalorder %s26, 0
      %p116 = por %p114, %p115
      %s118 = sadd.s32 %s117, 1
      %p121 = scmp.eq.s32.totalorder %s20, 1
      %p122 = scmp.ne.s32.totalorder %s117, %s119
      %p123 = scmp.eq.s32.totalorder %s20, 0
      %p124 = por %p122, %p123
      %p125 = scmp.ne.s32.totalorder %s117, %s119
      %p126 = scmp.eq.s32.totalorder %s25, 1
      %p127 = por %p125, %p126
      %p128 = scmp.ne.s32.totalorder %s119, %s120
      %p129 = scmp.eq.s32.totalorder %s25, 0
      %p130 = por %p128, %p129
      %p131 = scmp.ne.s32.totalorder %s119, %s120
      %p132 = scmp.eq.s32.totalorder %s26, 1
      %p133 = por %p131, %p132
      %p135 = scmp.ne.s32.totalorder %s120, %s134
      %p136 = scmp.eq.s32.totalorder %s26, 0
      %p137 = por %p135, %p136
      %s139 = sadd.s32 %s138, 1
      %p142 = scmp.eq.s32.totalorder %s20, 1
      %p143 = scmp.ne.s32.totalorder %s138, %s140
      %p144 = scmp.eq.s32.totalorder %s20, 0
      %p145 = por %p143, %p144
      %p146 = scmp.ne.s32.totalorder %s138, %s140
      %p147 = scmp.eq.s32.totalorder %s25, 1
      %p148 = por %p146, %p147
      %p149 = scmp.ne.s32.totalorder %s140, %s141
      %p150 = scmp.eq.s32.totalorder %s25, 0
      %p151 = por %p149, %p150
      %p152 = scmp.ne.s32.totalorder %s140, %s141
      %p153 = scmp.eq.s32.totalorder %s26, 1
      %p154 = por %p152, %p153
      %p156 = scmp.ne.s32.totalorder %s141, %s155
      %p157 = scmp.eq.s32.totalorder %s26, 0
      %p158 = por %p156, %p157
      %s160 = sadd.s32 %s159, 1
      %p163 = scmp.eq.s32.totalorder %s20, 1
      %p164 = scmp.ne.s32.totalorder %s159, %s161
      %p165 = scmp.eq.s32.totalorder %s20, 0
      %p166 = por %p164, %p165
      %p167 = scmp.ne.s32.totalorder %s159, %s161
      %p168 = scmp.eq.s32.totalorder %s25, 1
      %p169 = por %p167, %p168
      %p170 = scmp.ne.s32.totalorder %s161, %s162
      %p171 = scmp.eq.s32.totalorder %s25, 0
      %p172 = por %p170, %p171
      %p173 = scmp.ne.s32.totalorder %s161, %s162
      %p174 = scmp.eq.s32.totalorder %s26, 1
      %p175 = por %p173, %p174
      %p177 = scmp.ne.s32.totalorder %s162, %s176
      %p178 = scmp.eq.s32.totalorder %s26, 0
      %p179 = por %p177, %p178
      %s180 = ssub.s32 %s20, %s27
      %p181 = scmp.eq.s32.totalorder %s180, 0
      %s183 = sadd.s32 %s182, 1
      %s184 = scalar_select %p181, %s182, %s183
      %p187 = pneg %p181
      %p188 = scmp.eq.s32.totalorder %s20, 1
      %p189 = por %p187, %p188
      %p190 = scmp.ne.s32.totalorder %s182, %s185
      %p191 = scmp.eq.s32.totalorder %s20, 0
      %p192 = por %p190, %p191
      %p193 = scmp.ne.s32.totalorder %s182, %s185
      %p194 = scmp.eq.s32.totalorder %s25, 1
      %p195 = por %p193, %p194
      %p196 = scmp.ne.s32.totalorder %s185, %s186
      %p197 = scmp.eq.s32.totalorder %s25, 0
      %p198 = por %p196, %p197
      %p199 = scmp.ne.s32.totalorder %s185, %s186
      %p200 = scmp.eq.s32.totalorder %s26, 1
      %p201 = por %p199, %p200
      %p203 = scmp.ne.s32.totalorder %s186, %s202
      %p204 = scmp.eq.s32.totalorder %s26, 0
      %p205 = por %p203, %p204
      %p206 = scmp.le.s32.totalorder 1, %s20
      %p207 = scmp.lt.s32.totalorder %s20, 3
      %p208 = pnand %p206, %p207
      %p209 = pneg %p208
      // Predicated region
      $region9: #{tpu_custom_call.1} parent=5 // pred_check
        _
      $region10: #{tpu_custom_call.1} parent=5 // pred_check_branch
        %211 = sbr.rel (%p208) target = $region12
      $region11: #{tpu_custom_call.1} parent=5 // pred_region
        %s212 = ssub.s32 %s20, 1
        // Predicated region
        $region13: #{tpu_custom_call.1} parent=11 // pred_check
          %p213 = pneg %p67
        $region14: #{tpu_custom_call.1} parent=11 // pred_check_branch
          %215 = sbr.rel (%p213) target = $region16
        $region15: #{tpu_custom_call.1} parent=11 // pred_region
          %s217 = ssub.s32 4096, 4096
          %218 = vsyncadd [#allocation6], %s217
          %s219 = sshll.u32 [#allocation5], 4
          %s220 = int_to_ptr.vmem [resolvable:$true] %s219
          %225 = dma.hbm_to_vmem [thread:$0]  %s1, 4096, %s220, [#allocation6], 256, 256, 16
        $region16: #{tpu_custom_call.1} parent=11 // pred_fallthru
          _
        // Predicated region
        $region17: #{tpu_custom_call.1} parent=11 // pred_check
          %p226 = pneg %p88
        $region18: #{tpu_custom_call.1} parent=11 // pred_check_branch
          %228 = sbr.rel (%p226) target = $region20
        $region19: #{tpu_custom_call.1} parent=11 // pred_region
          _
        $region20: #{tpu_custom_call.1} parent=11 // pred_fallthru
          _
        // Predicated region
        $region21: #{tpu_custom_call.1} parent=11 // pred_check
          %p229 = pneg %p109
        $region22: #{tpu_custom_call.1} parent=11 // pred_check_branch
          %231 = sbr.rel (%p229) target = $region24
        $region23: #{tpu_custom_call.1} parent=11 // pred_region
          %s233 = ssub.s32 4096, 4096
          %234 = vsyncadd [#allocation6], %s233
          %s235 = sshll.u32 [#allocation7], 4
          %s236 = int_to_ptr.vmem [resolvable:$true] %s235
          %241 = dma.hbm_to_vmem [thread:$0]  %s3, 4096, %s236, [#allocation6], 128, 128, 8
        $region24: #{tpu_custom_call.1} parent=11 // pred_fallthru
          _
        // Predicated region
        $region25: #{tpu_custom_call.1} parent=11 // pred_check
          %p242 = pneg %p130
        $region26: #{tpu_custom_call.1} parent=11 // pred_check_branch
          %244 = sbr.rel (%p242) target = $region28
        $region27: #{tpu_custom_call.1} parent=11 // pred_region
          _
        $region28: #{tpu_custom_call.1} parent=11 // pred_fallthru
          _
        // Predicated region
        $region29: #{tpu_custom_call.1} parent=11 // pred_check
          %p245 = pneg %p151
        $region30: #{tpu_custom_call.1} parent=11 // pred_check_branch
          %247 = sbr.rel (%p245) target = $region32
        $region31: #{tpu_custom_call.1} parent=11 // pred_region
          _
        $region32: #{tpu_custom_call.1} parent=11 // pred_fallthru
          _
        // Predicated region
        $region33: #{tpu_custom_call.1} parent=11 // pred_check
          %p248 = pneg %p172
        $region34: #{tpu_custom_call.1} parent=11 // pred_check_branch
          %250 = sbr.rel (%p248) target = $region36
        $region35: #{tpu_custom_call.1} parent=11 // pred_region
          _
        $region36: #{tpu_custom_call.1} parent=11 // pred_fallthru
          _
      $region12: #{tpu_custom_call.1} parent=5 // pred_fallthru
        _
      %p251 = scmp.lt.s32.totalorder %s20, 2
      // Predicated region
      $region37: #{tpu_custom_call.1} parent=5 // pred_check
        %p252 = pneg %p251
      $region38: #{tpu_custom_call.1} parent=5 // pred_check_branch
        %254 = sbr.rel (%p252) target = $region40
      $region39: #{tpu_custom_call.1} parent=5 // pred_region
        // Predicated region
        $region41: #{tpu_custom_call.1} parent=39 // pred_check
          %p255 = pneg %p40
        $region42: #{tpu_custom_call.1} parent=39 // pred_check_branch
          %257 = sbr.rel (%p255) target = $region44
        $region43: #{tpu_custom_call.1} parent=39 // pred_region
          %s258 = sand.u32 %s30, 1
          %s259 = scalar_lea.sflag [#allocation3], %s258
          %s260 = sand.u32 %s30, 1
          %s261 = smul.addr %s260, 8
          %s262 = scalar_lea.vmem [#allocation2], %s261
          %s264 = ssub.s32 128, 128
          %265 = vsyncadd %s259, %s264
          %s266 = smul.addr %s20, 128
          %s267 = scalar_lea.hbm %s0, %s266
          %s269 = sshll.u32 %s262, 4
          %s270 = int_to_ptr.vmem [resolvable:$true] %s269
          %272 = dma.hbm_to_vmem [thread:$0]  %s267, 128, %s270, %s259
        $region44: #{tpu_custom_call.1} parent=39 // pred_fallthru
          _
      $region40: #{tpu_custom_call.1} parent=5 // pred_fallthru
        _
      %p273 = scmp.le.s32.totalorder 1, %s20
      %p274 = scmp.lt.s32.totalorder %s20, 3
      %p275 = pnand %p273, %p274
      %p276 = pneg %p275
      // Predicated region
      $region45: #{tpu_custom_call.1} parent=5 // pred_check
        _
      $region46: #{tpu_custom_call.1} parent=5 // pred_check_branch
        %278 = sbr.rel (%p275) target = $region48
      $region47: #{tpu_custom_call.1} parent=5 // pred_region
        %s279 = ssub.s32 %s20, 1
        %s280 = sand.u32 %s33, 1
        %s281 = scalar_lea.sflag [#allocation3], %s280
        %s282 = sand.u32 %s33, 1
        %s283 = smul.addr %s282, 8
        %s284 = scalar_lea.vmem [#allocation2], %s283
        // Predicated region
        $region49: #{tpu_custom_call.1} parent=47 // pred_check
          %p285 = pneg %p46
        $region50: #{tpu_custom_call.1} parent=47 // pred_check_branch
          %287 = sbr.rel (%p285) target = $region52
        $region51: #{tpu_custom_call.1} parent=47 // pred_region
          %288 = dma.done %s281, 128
        $region52: #{tpu_custom_call.1} parent=47 // pred_fallthru
          _
        // Predicated region
        $region53: #{tpu_custom_call.1} parent=47 // pred_check
          %p289 = pneg %p67
        $region54: #{tpu_custom_call.1} parent=47 // pred_check_branch
          %291 = sbr.rel (%p289) target = $region56
        $region55: #{tpu_custom_call.1} parent=47 // pred_region
          %292 = dma.done [#allocation6], 4096
        $region56: #{tpu_custom_call.1} parent=47 // pred_fallthru
          _
        // Predicated region
        $region57: #{tpu_custom_call.1} parent=47 // pred_check
          %p293 = pneg %p109
        $region58: #{tpu_custom_call.1} parent=47 // pred_check_branch
          %295 = sbr.rel (%p293) target = $region60
        $region59: #{tpu_custom_call.1} parent=47 // pred_region
          %296 = dma.done [#allocation6], 4096
        $region60: #{tpu_custom_call.1} parent=47 // pred_fallthru
          _
        %s297 = sand.u32 %s33, 1
        %s298 = scalar_lea.sflag [#allocation3], %s297
        %s299 = sand.u32 %s33, 1
        %s300 = smul.addr %s299, 8
        %s301 = scalar_lea.vmem [#allocation2], %s300
        %p302 = pneg %p46
        %p303 = pneg %p43
        %p304 = pneg %p67
        %p305 = pneg %p64
        %p306 = pneg %p88
        %p307 = pneg %p85
        %p308 = pneg %p109
        %p309 = pneg %p106
        %p310 = pneg %p130
        %p311 = pneg %p127
        %p312 = pneg %p151
        %p313 = pneg %p148
        %p314 = pneg %p172
        %p315 = pneg %p169
        %p316 = pneg %p198
        %p317 = pneg %p195
        %s318 = sand.u32 %s185, 1
        %s319 = scalar_lea.sflag [#allocation4], %s318
        %s320 = sand.u32 %s185, 1
        %s321 = smul.addr %s320, 8
        %s322 = scalar_lea.vmem [#allocation8], %s321
        %v323 = vld [vmem:[%s284] sm:$0xff]
        %324 = vadd.xlane.f32.xlu0 %v323
        %v325 = vpop.xlane.xlu0 %324
        %v326 = vrcp.pop 128.0
        %v327 = vmul.f32 %v325, %v326
        %v328 = vmul.f32 %v323, %v323
        %329 = vadd.xlane.f32.xlu0 %v328
        %v330 = vpop.xlane.xlu0 %329
        %v331 = vmul.f32 %v330, %v326
        %v332 = vmul.f32 %v327, %v327
        %v333 = vsub.f32 %v331, %v332
        %v334 = vsub.f32 %v323, %v327
        %v335 = vadd.f32 %v333, 1e-05
        %v336 = vrsqrt.pop %v335
        %v337 = vmul.f32 %v334, %v336
        %v338 = vld [vmem:[%s5] sm:$0x1]
        %v340 = vlaneseq
        %v341 = vshrl.u32 %v340, 7
        %v342 = vsub.s32 0, %v341
        %v343 = vrot.slane %v338, %v342
        %v345 = vmul.f32 %v337, %v343
        %v346 = vld [vmem:[%s6] sm:$0x1]
        %v348 = vlaneseq
        %v349 = vshrl.u32 %v348, 7
        %v350 = vsub.s32 0, %v349
        %v351 = vrot.slane %v346, %v350
        %v353 = vadd.f32 %v345, %v351
        %v354 = vld [vmem:[#allocation5] sm:$0xff]
        %v355 = vld [vmem:[#allocation5 + $0x8] sm:$0xff]
        %v356 = vld [vmem:[#allocation5 + $0x10] sm:$0xff]
        %v357 = vld [vmem:[#allocation5 + $0x18] sm:$0xff]
        %v358 = vld [vmem:[#allocation5 + $0x20] sm:$0xff]
        %v359 = vld [vmem:[#allocation5 + $0x28] sm:$0xff]
        %v360 = vld [vmem:[#allocation5 + $0x30] sm:$0xff]
        %v361 = vld [vmem:[#allocation5 + $0x38] sm:$0xff]
        %v362 = vld [vmem:[#allocation5 + $0x40] sm:$0xff]
        %v363 = vld [vmem:[#allocation5 + $0x48] sm:$0xff]
        %v364 = vld [vmem:[#allocation5 + $0x50] sm:$0xff]
        %v365 = vld [vmem:[#allocation5 + $0x58] sm:$0xff]
        %v366 = vld [vmem:[#allocation5 + $0x60] sm:$0xff]
        %v367 = vld [vmem:[#allocation5 + $0x68] sm:$0xff]
        %v368 = vld [vmem:[#allocation5 + $0x70] sm:$0xff]
        %v369 = vld [vmem:[#allocation5 + $0x78] sm:$0xff]
        %v370 = vld [vmem:[#allocation5 + $0x80] sm:$0xff]
        %v371 = vld [vmem:[#allocation5 + $0x88] sm:$0xff]
        %v372 = vld [vmem:[#allocation5 + $0x90] sm:$0xff]
        %v373 = vld [vmem:[#allocation5 + $0x98] sm:$0xff]
        %v374 = vld [vmem:[#allocation5 + $0xa0] sm:$0xff]
        %v375 = vld [vmem:[#allocation5 + $0xa8] sm:$0xff]
        %v376 = vld [vmem:[#allocation5 + $0xb0] sm:$0xff]
        %v377 = vld [vmem:[#allocation5 + $0xb8] sm:$0xff]
        %v378 = vld [vmem:[#allocation5 + $0xc0] sm:$0xff]
        %v379 = vld [vmem:[#allocation5 + $0xc8] sm:$0xff]
        %v380 = vld [vmem:[#allocation5 + $0xd0] sm:$0xff]
        %v381 = vld [vmem:[#allocation5 + $0xd8] sm:$0xff]
        %v382 = vld [vmem:[#allocation5 + $0xe0] sm:$0xff]
        %v383 = vld [vmem:[#allocation5 + $0xe8] sm:$0xff]
        %v384 = vld [vmem:[#allocation5 + $0xf0] sm:$0xff]
        %v385 = vld [vmem:[#allocation5 + $0xf8] sm:$0xff]
        %v386 = vld [vmem:[%s2] sm:$0x3]
        %v388 = vlaneseq
        %v389 = vshrl.u32 %v388, 7
        %v390 = vsub.s32 0, %v389
        %v391 = vrot.slane %v386, %v390
        %v392 = vlaneseq
        %v393 = vshrl.u32 %v392, 7
        %v394 = vsub.s32 1, %v393
        %v395 = vrot.slane %v386, %v394
        %398 = vmatprep.subr.mxu0 %v355
        %399 = vmatpush1.msra.mxu0 %v354
        %400 = vmatprep.subr.mxu0 %v357
        %401 = vmatpush1.msra.mxu0 %v356
        %402 = vmatprep.subr.mxu0 %v359
        %403 = vmatpush1.msra.mxu0 %v358
        %404 = vmatprep.subr.mxu0 %v361
        %405 = vmatpush1.msra.mxu0 %v360
        %406 = vmatprep.subr.mxu0 %v363
        %407 = vmatpush1.msra.mxu0 %v362
        %408 = vmatprep.subr.mxu0 %v365
        %409 = vmatpush1.msra.mxu0 %v364
        %410 = vmatprep.subr.mxu0 %v367
        %411 = vmatpush1.msra.mxu0 %v366
        %412 = vmatprep.subr.mxu0 %v369
        %413 = vmatpush1.msra.mxu0 %v368
        %414 = vmatprep.subr.mxu0 %v371
        %415 = vmatpush1.msra.mxu0 %v370
        %416 = vmatprep.subr.mxu0 %v373
        %417 = vmatpush1.msra.mxu0 %v372
        %418 = vmatprep.subr.mxu0 %v375
        %419 = vmatpush1.msra.mxu0 %v374
        %420 = vmatprep.subr.mxu0 %v377
        %421 = vmatpush1.msra.mxu0 %v376
        %422 = vmatprep.subr.mxu0 %v379
        %423 = vmatpush1.msra.mxu0 %v378
        %424 = vmatprep.subr.mxu0 %v381
        %425 = vmatpush1.msra.mxu0 %v380
        %426 = vmatprep.subr.mxu0 %v383
        %427 = vmatpush1.msra.mxu0 %v382
        %428 = vmatprep.subr.mxu0 %v385
        %429 = vmatpush1.msra.mxu0 %v384
        %430 = vmatprep.subr.mxu0 0.0
        %431 = vmatpush1.msra.mxu0 0.0
        %432 = vmatprep.subr.mxu0 0.0
        %433 = vmatpush1.msra.mxu0 0.0
        %434 = vmatprep.subr.mxu0 0.0
        %435 = vmatpush1.msra.mxu0 0.0
        %436 = vmatprep.subr.mxu0 0.0
        %437 = vmatpush1.msra.mxu0 0.0
        %438 = vmatprep.subr.mxu0 0.0
        %439 = vmatpush1.msra.mxu0 0.0
        %440 = vmatprep.subr.mxu0 0.0
        %441 = vmatpush1.msra.mxu0 0.0
        %442 = vmatprep.subr.mxu0 0.0
        %443 = vmatpush1.msra.mxu0 0.0
        %444 = vmatprep.subr.mxu0 0.0
        %445 = vmatpush1.msra.mxu0 0.0
        %446 = vmatprep.subr.mxu0 0.0
        %447 = vmatpush1.msra.mxu0 0.0
        %448 = vmatprep.subr.mxu0 0.0
        %449 = vmatpush1.msra.mxu0 0.0
        %450 = vmatprep.subr.mxu0 0.0
        %451 = vmatpush1.msra.mxu0 0.0
        %452 = vmatprep.subr.mxu0 0.0
        %453 = vmatpush1.msra.mxu0 0.0
        %454 = vmatprep.subr.mxu0 0.0
        %455 = vmatpush1.msra.mxu0 0.0
        %456 = vmatprep.subr.mxu0 0.0
        %457 = vmatpush1.msra.mxu0 0.0
        %458 = vmatprep.subr.mxu0 0.0
        %459 = vmatpush1.msra.mxu0 0.0
        %460 = vmatprep.subr.mxu0 0.0
        %461 = vmatpush1.msra.mxu0 0.0
        %462 = vmatprep.mubr.f32.mxu0 0.0
        %463 = vmatmul.mubr.f32.gmra.mrb[0].mxu0 %v353
        %v464 = vpop.f32.mrb[0].mxu0
        %v465 = vadd.f32 %v391, %v464
        %v466 = vpop.f32.mrb[0].mxu0
        %v467 = vadd.f32 %v395, %v466
        %468 = vdwg.mxu0
        %v469 = vmul.f32 %v465, 0.5
        %v470 = vmul.f32 %v467, 0.5
        %v471 = vmul.f32 %v465, 0.70710677
        %v472 = vmul.f32 %v467, 0.70710677
        %v473 = verf.f32.pop %v471
        %v474 = verf.f32.pop %v472
        %v475 = vadd.f32 %v473, 1.0
        %v476 = vadd.f32 %v474, 1.0
        %v477 = vmul.f32 %v469, %v475
        %v478 = vmul.f32 %v470, %v476
        %v479 = vld [vmem:[#allocation7] sm:$0xff]
        %v480 = vld [vmem:[#allocation7 + $0x8] sm:$0xff]
        %v481 = vld [vmem:[#allocation7 + $0x10] sm:$0xff]
        %v482 = vld [vmem:[#allocation7 + $0x18] sm:$0xff]
        %v483 = vld [vmem:[#allocation7 + $0x20] sm:$0xff]
        %v484 = vld [vmem:[#allocation7 + $0x28] sm:$0xff]
        %v485 = vld [vmem:[#allocation7 + $0x30] sm:$0xff]
        %v486 = vld [vmem:[#allocation7 + $0x38] sm:$0xff]
        %v487 = vld [vmem:[#allocation7 + $0x40] sm:$0xff]
        %v488 = vld [vmem:[#allocation7 + $0x48] sm:$0xff]
        %v489 = vld [vmem:[#allocation7 + $0x50] sm:$0xff]
        %v490 = vld [vmem:[#allocation7 + $0x58] sm:$0xff]
        %v491 = vld [vmem:[#allocation7 + $0x60] sm:$0xff]
        %v492 = vld [vmem:[#allocation7 + $0x68] sm:$0xff]
        %v493 = vld [vmem:[#allocation7 + $0x70] sm:$0xff]
        %v494 = vld [vmem:[#allocation7 + $0x78] sm:$0xff]
        %v495 = vld [vmem:[#allocation7 + $0x80] sm:$0xff]
        %v496 = vld [vmem:[#allocation7 + $0x88] sm:$0xff]
        %v497 = vld [vmem:[#allocation7 + $0x90] sm:$0xff]
        %v498 = vld [vmem:[#allocation7 + $0x98] sm:$0xff]
        %v499 = vld [vmem:[#allocation7 + $0xa0] sm:$0xff]
        %v500 = vld [vmem:[#allocation7 + $0xa8] sm:$0xff]
        %v501 = vld [vmem:[#allocation7 + $0xb0] sm:$0xff]
        %v502 = vld [vmem:[#allocation7 + $0xb8] sm:$0xff]
        %v503 = vld [vmem:[#allocation7 + $0xc0] sm:$0xff]
        %v504 = vld [vmem:[#allocation7 + $0xc8] sm:$0xff]
        %v505 = vld [vmem:[#allocation7 + $0xd0] sm:$0xff]
        %v506 = vld [vmem:[#allocation7 + $0xd8] sm:$0xff]
        %v507 = vld [vmem:[#allocation7 + $0xe0] sm:$0xff]
        %v508 = vld [vmem:[#allocation7 + $0xe8] sm:$0xff]
        %v509 = vld [vmem:[#allocation7 + $0xf0] sm:$0xff]
        %v510 = vld [vmem:[#allocation7 + $0xf8] sm:$0xff]
        %v511 = vld [vmem:[%s4] sm:$0x1]
        %v513 = vlaneseq
        %v514 = vshrl.u32 %v513, 7
        %v515 = vsub.s32 0, %v514
        %v516 = vrot.slane %v511, %v515
        %518 = vmatprep.subr.mxu0 0.0
        %519 = vmatpush1.msra.mxu0 %v479
        %520 = vmatprep.subr.mxu0 0.0
        %521 = vmatpush1.msra.mxu0 %v480
        %522 = vmatprep.subr.mxu0 0.0
        %523 = vmatpush1.msra.mxu0 %v481
        %524 = vmatprep.subr.mxu0 0.0
        %525 = vmatpush1.msra.mxu0 %v482
        %526 = vmatprep.subr.mxu0 0.0
        %527 = vmatpush1.msra.mxu0 %v483
        %528 = vmatprep.subr.mxu0 0.0
        %529 = vmatpush1.msra.mxu0 %v484
        %530 = vmatprep.subr.mxu0 0.0
        %531 = vmatpush1.msra.mxu0 %v485
        %532 = vmatprep.subr.mxu0 0.0
        %533 = vmatpush1.msra.mxu0 %v486
        %534 = vmatprep.subr.mxu0 0.0
        %535 = vmatpush1.msra.mxu0 %v487
        %536 = vmatprep.subr.mxu0 0.0
        %537 = vmatpush1.msra.mxu0 %v488
        %538 = vmatprep.subr.mxu0 0.0
        %539 = vmatpush1.msra.mxu0 %v489
        %540 = vmatprep.subr.mxu0 0.0
        %541 = vmatpush1.msra.mxu0 %v490
        %542 = vmatprep.subr.mxu0 0.0
        %543 = vmatpush1.msra.mxu0 %v491
        %544 = vmatprep.subr.mxu0 0.0
        %545 = vmatpush1.msra.mxu0 %v492
        %546 = vmatprep.subr.mxu0 0.0
        %547 = vmatpush1.msra.mxu0 %v493
        %548 = vmatprep.subr.mxu0 0.0
        %549 = vmatpush1.msra.mxu0 %v494
        %550 = vmatprep.subr.mxu0 0.0
        %551 = vmatpush1.msra.mxu0 %v495
        %552 = vmatprep.subr.mxu0 0.0
        %553 = vmatpush1.msra.mxu0 %v496
        %554 = vmatprep.subr.mxu0 0.0
        %555 = vmatpush1.msra.mxu0 %v497
        %556 = vmatprep.subr.mxu0 0.0
        %557 = vmatpush1.msra.mxu0 %v498
        %558 = vmatprep.subr.mxu0 0.0
        %559 = vmatpush1.msra.mxu0 %v499
        %560 = vmatprep.subr.mxu0 0.0
        %561 = vmatpush1.msra.mxu0 %v500
        %562 = vmatprep.subr.mxu0 0.0
        %563 = vmatpush1.msra.mxu0 %v501
        %564 = vmatprep.subr.mxu0 0.0
        %565 = vmatpush1.msra.mxu0 %v502
        %566 = vmatprep.subr.mxu0 0.0
        %567 = vmatpush1.msra.mxu0 %v503
        %568 = vmatprep.subr.mxu0 0.0
        %569 = vmatpush1.msra.mxu0 %v504
        %570 = vmatprep.subr.mxu0 0.0
        %571 = vmatpush1.msra.mxu0 %v505
        %572 = vmatprep.subr.mxu0 0.0
        %573 = vmatpush1.msra.mxu0 %v506
        %574 = vmatprep.subr.mxu0 0.0
        %575 = vmatpush1.msra.mxu0 %v507
        %576 = vmatprep.subr.mxu0 0.0
        %577 = vmatpush1.msra.mxu0 %v508
        %578 = vmatprep.subr.mxu0 0.0
        %579 = vmatpush1.msra.mxu0 %v509
        %580 = vmatprep.subr.mxu0 0.0
        %581 = vmatpush1.msra.mxu0 %v510
        %582 = vmatprep.mubr.f32.mxu0 %v478
        %583 = vmatmul.mubr.f32.gmra.mrb[0].mxu0 %v477
        %v584 = vpop.f32.mrb[0].mxu0
        %v585 = vadd.f32 %v516, %v584
        %v586 = vpop.f32.mrb[0].mxu0
        %587 = vdwg.mxu0
        %v588 = vadd.f32 %v323, %v585
        %589 = vst [vmem:[%s322] sm:$0xff] %v588
        %s590 = sand.u32 %s185, 1
        %s591 = scalar_lea.sflag [#allocation4], %s590
        %s592 = sand.u32 %s185, 1
        %s593 = smul.addr %s592, 8
        %s594 = scalar_lea.vmem [#allocation8], %s593
        // Predicated region
        $region61: #{tpu_custom_call.1} parent=47 // pred_check
          %p595 = pneg %p195
        $region62: #{tpu_custom_call.1} parent=47 // pred_check_branch
          %597 = sbr.rel (%p595) target = $region64
        $region63: #{tpu_custom_call.1} parent=47 // pred_region
          %s599 = ssub.s32 128, 128
          %600 = vsyncadd %s591, %s599
          %s601 = smul.addr %s25, 128
          %s602 = scalar_lea.hbm %s7, %s601
          %s604 = sshll.u32 %s594, 4
          %s605 = int_to_ptr.vmem [resolvable:$true] %s604
          %607 = dma.vmem_to_hbm [thread:$0]  %s605, 128, %s602, %s591
        $region64: #{tpu_custom_call.1} parent=47 // pred_fallthru
          _
      $region48: #{tpu_custom_call.1} parent=5 // pred_fallthru
        _
      %p608 = scmp.le.s32.totalorder 2, %s20
      // Predicated region
      $region65: #{tpu_custom_call.1} parent=5 // pred_check
        %p609 = pneg %p608
      $region66: #{tpu_custom_call.1} parent=5 // pred_check_branch
        %611 = sbr.rel (%p609) target = $region68
      $region67: #{tpu_custom_call.1} parent=5 // pred_region
        %s612 = ssub.s32 %s20, 2
        // Predicated region
        $region69: #{tpu_custom_call.1} parent=67 // pred_check
          %p613 = pneg %p201
        $region70: #{tpu_custom_call.1} parent=67 // pred_check_branch
          %615 = sbr.rel (%p613) target = $region72
        $region71: #{tpu_custom_call.1} parent=67 // pred_region
          %s616 = sand.u32 %s186, 1
          %s617 = scalar_lea.sflag [#allocation4], %s616
          %s618 = sand.u32 %s186, 1
          %s619 = smul.addr %s618, 8
          %s620 = scalar_lea.vmem [#allocation8], %s619
          %621 = dma.done %s617, 128
        $region72: #{tpu_custom_call.1} parent=67 // pred_fallthru
          _
      $region68: #{tpu_custom_call.1} parent=5 // pred_fallthru
        _
    $region6: #{tpu_custom_call.1} parent=1 // loop_footer
      %s24 = sadd.s32 1, %s20
    $region7: #{tpu_custom_call.1} parent=1 // loop_footer_branch
      %19 = sbr.rel target = $region3
    $region8: #{tpu_custom_call.1} parent=1 // loop_exit
      _
    %622 = vsyncpa [#allocation3], 1
    %s623 = scalar_lea.sflag [#allocation3], 1
    %624 = vsyncpa %s623, 1
    %625 = vsyncpa [#allocation6], 1
    %626 = vsyncpa [#allocation4], 1
    %s627 = scalar_lea.sflag [#allocation4], 1
    %628 = vsyncpa %s627, 1

</llo_original>
